<compile_context>
chip_gen: v5e
topology: v5e:2x2
jax: 0.10.0
libtpu: 0.0.40
codegen_flags: <defaults>
</compile_context>

<pallas_src>
import functools

import jax
import jax.numpy as jnp
from jax.experimental import pallas as pl
from jax.experimental.pallas import tpu as pltpu


# ---------------------------------------------------------------------------
# parameter-only glue (tiny, runs once on (Cout, Cin, k)-sized tensors)
# ---------------------------------------------------------------------------
def _weight_norm(v, g):
    # torch.nn.utils.weight_norm with default dim=0:  W = g * v / ||v||_(1,2)
    norm = jnp.sqrt(jnp.sum(v * v, axis=(1, 2), keepdims=True))
    return v * (g.reshape(-1, 1, 1) / norm)


def _fold_bn_into_conv(W, b, gamma, beta, mean, var, eps):
    # inference BatchNorm folded into the conv (per output channel):
    #   bn(conv(x) + b) = conv(x) * s + ((b - mean) * s + beta),  s = gamma/sqrt(var+eps)
    scale = gamma / jnp.sqrt(var + eps)                  # (Cout,)
    W_eff = W * scale[:, None, None]                     # (Cout, Cin, k)
    b_eff = (b - mean) * scale + beta                    # (Cout,)
    return W_eff, b_eff


# ---------------------------------------------------------------------------
# fused Pallas kernel: both convs + BN + chomp + ReLU + residual + LeakyReLU
# ---------------------------------------------------------------------------
def _temporal_block_kernel(x_ref, w1_ref, b1_ref, w2_ref, b2_ref, *rest,
                           kernel_size, dilation, padding, neg_slope,
                           has_downsample):
    if has_downsample:
        wd_ref, bd_ref, o_ref = rest
    else:
        (o_ref,) = rest

    k, d, p = kernel_size, dilation, padding
    x = x_ref[0].astype(jnp.float32)                     # (L, Cin)
    L = x.shape[0]
    c_out = w1_ref.shape[2]

    def causal_conv(h, w_ref, b_ref):
        # h: (L, c_in).  Left zero-pad by p in VMEM (never in HBM), then the
        # dilated causal conv (= conv + chomp) is k shifted MXU matmuls.
        c_in = h.shape[1]
        if p > 0:
            hp = jnp.concatenate(
                [jnp.zeros((p, c_in), jnp.float32), h], axis=0)   # (L + p, c_in)
        else:
            hp = h
        acc = jnp.zeros((L, c_out), jnp.float32) + b_ref[...].astype(jnp.float32)
        for j in range(k):                                # static unroll over taps
            acc = acc + jnp.dot(hp[j * d:j * d + L, :],
                                w_ref[j].astype(jnp.float32),
                                preferred_element_type=jnp.float32)
        return acc

    # conv1 -> bn1 (folded) -> chomp -> relu  (dropout = identity at inference)
    h1 = jnp.maximum(causal_conv(x, w1_ref, b1_ref), 0.0)
    # conv2 -> bn2 (folded) -> chomp -> relu
    h2 = jnp.maximum(causal_conv(h1, w2_ref, b2_ref), 0.0)

    # residual branch
    if has_downsample:
        res = (jnp.dot(x, wd_ref[...].astype(jnp.float32),
                       preferred_element_type=jnp.float32)
               + bd_ref[...].astype(jnp.float32))
    else:
        res = x

    y = h2 + res
    o_ref[0] = jnp.where(y > 0, y, neg_slope * y).astype(o_ref.dtype)


# ---------------------------------------------------------------------------
# wrapper matching TemporalBlock.forward (eval mode)
# ---------------------------------------------------------------------------
def temporal_block(x, params, *, kernel_size, stride, dilation, padding,
                   eps=1e-5, negative_slope=0.3):
    """x: (B, C_in, L) -> (B, C_out, L), matching TemporalBlock.forward (eval)."""
    # TODO(synk): stride > 1 not implemented (canonical TCN TemporalBlock uses stride=1).
    assert stride == 1, "only stride=1 supported"
    B, c_in, L = x.shape
    k, d, p = kernel_size, dilation, padding
    # PyTorch itself needs this for `out + res` to be shape-compatible:
    assert p == d * (k - 1), "padding must equal dilation*(kernel_size-1)"

    c_out = params["v1"].shape[0]

    # ---- fold weight_norm + inference BatchNorm + conv bias (param glue) ----
    W1 = _weight_norm(params["v1"], params["g1"])
    W1, b1 = _fold_bn_into_conv(W1, params["b1"], params["gamma1"],
                                params["beta1"], params["mean1"],
                                params["var1"], eps)
    W2 = _weight_norm(params["v2"], params["g2"])
    W2, b2 = _fold_bn_into_conv(W2, params["b2"], params["gamma2"],
                                params["beta2"], params["mean2"],
                                params["var2"], eps)

    w1 = jnp.transpose(W1, (2, 1, 0)).astype(jnp.float32)    # (k, Cin, Cout)
    w2 = jnp.transpose(W2, (2, 1, 0)).astype(jnp.float32)    # (k, Cout, Cout)
    b1 = b1.reshape(1, c_out).astype(jnp.float32)
    b2 = b2.reshape(1, c_out).astype(jnp.float32)

    has_downsample = c_in != c_out

    # channels-last layout for the kernel (lane axis = channels)
    inputs = [jnp.transpose(x, (0, 2, 1)), w1, b1, w2, b2]
    in_specs = [
        pl.BlockSpec((1, L, c_in), lambda b: (b, 0, 0)),
        pl.BlockSpec((k, c_in, c_out), lambda b: (0, 0, 0)),
        pl.BlockSpec((1, c_out), lambda b: (0, 0)),
        pl.BlockSpec((k, c_out, c_out), lambda b: (0, 0, 0)),
        pl.BlockSpec((1, c_out), lambda b: (0, 0)),
    ]
    if has_downsample:
        wd = jnp.transpose(params["wd"][:, :, 0], (1, 0)).astype(jnp.float32)
        bd = params["bd"].reshape(1, c_out).astype(jnp.float32)
        inputs += [wd, bd]
        in_specs += [pl.BlockSpec((c_in, c_out), lambda b: (0, 0)),
                     pl.BlockSpec((1, c_out), lambda b: (0, 0))]

    kernel = functools.partial(
        _temporal_block_kernel, kernel_size=k, dilation=d, padding=p,
        neg_slope=negative_slope, has_downsample=has_downsample)

    out_blc = pl.pallas_call(
        kernel,
        out_shape=jax.ShapeDtypeStruct((B, L, c_out), x.dtype),
        grid_spec=pltpu.PrefetchScalarGridSpec(
            num_scalar_prefetch=0,
            grid=(B,),
            in_specs=in_specs,
            out_specs=pl.BlockSpec((1, L, c_out), lambda b: (b, 0, 0)),
        ),
        compiler_params=pltpu.CompilerParams(
            dimension_semantics=("parallel",)),
    )(*inputs)

    return jnp.transpose(out_blc, (0, 2, 1))                 # back to (B, Cout, L)


# ---------------------------------------------------------------------------
# pure-JAX reference mirroring the PyTorch forward (no folding) for checking
# ---------------------------------------------------------------------------
def _reference(x, params, *, kernel_size, dilation, padding, eps=1e-5,
               negative_slope=0.3):
    k, d, p = kernel_size, dilation, padding
    hi = jax.lax.Precision.HIGHEST

    def conv(h, W, b):
        y = jax.lax.conv_general_dilated(
            h, W, window_strides=(1,), padding=[(p, p)], rhs_dilation=(d,),
            dimension_numbers=("NCH", "OIH", "NCH"), precision=hi)
        return y + b[None, :, None]

    def bn(h, gamma, beta, mean, var):
        return ((h - mean[None, :, None]) / jnp.sqrt(var[None, :, None] + eps)
                * gamma[None, :, None] + beta[None, :, None])

    def chomp(h):
        return h[:, :, :-p] if p > 0 else h

    W1 = _weight_norm(params["v1"], params["g1"])
    h = conv(x, W1, params["b1"])
    h = bn(h, params["gamma1"], params["beta1"], params["mean1"], params["var1"])
    h = jnp.maximum(chomp(h), 0.0)
    W2 = _weight_norm(params["v2"], params["g2"])
    h = conv(h, W2, params["b2"])
    h = bn(h, params["gamma2"], params["beta2"], params["mean2"], params["var2"])
    h = jnp.maximum(chomp(h), 0.0)

    if "wd" in params:
        res = jnp.einsum("oc,bcl->bol", params["wd"][:, :, 0], x,
                         precision=hi) + params["bd"][None, :, None]
    else:
        res = x
    y = h + res
    return jnp.where(y > 0, y, negative_slope * y)


def _make_params(key, c_in, c_out, k, downsample):
    ks = jax.random.split(key, 16)

    def n(i, shape, s=0.1):
        return s * jax.random.normal(ks[i], shape, dtype=jnp.float32)

    params = dict(
        v1=n(0, (c_out, c_in, k)), g1=1.0 + n(1, (c_out,)), b1=n(2, (c_out,)),
        gamma1=1.0 + n(3, (c_out,)), beta1=n(4, (c_out,)),
        mean1=n(5, (c_out,)), var1=1.0 + jnp.abs(n(6, (c_out,))),
        v2=n(7, (c_out, c_out, k)), g2=1.0 + n(8, (c_out,)), b2=n(9, (c_out,)),
        gamma2=1.0 + n(10, (c_out,)), beta2=n(11, (c_out,)),
        mean2=n(12, (c_out,)), var2=1.0 + jnp.abs(n(13, (c_out,))),
    )
    if downsample:
        params["wd"] = n(14, (c_out, c_in, 1))
        params["bd"] = n(15, (c_out,))
    return params


if __name__ == "__main__":
    root = jax.random.PRNGKey(0)
    k_x1, k_p1, k_x2, k_p2 = jax.random.split(root, 4)

    ksz, dil, stride = 3, 2, 1
    pad = dil * (ksz - 1)

    # Config 1: C_in != C_out  -> exercises the 1x1 downsample residual path.
    B, Cin, Cout, L = 2, 16, 32, 48
    params1 = _make_params(k_p1, Cin, Cout, ksz, downsample=True)
    x1 = jax.random.normal(k_x1, (B, Cin, L), dtype=jnp.float32)
    out1 = jax.block_until_ready(
        temporal_block(x1, params1, kernel_size=ksz, stride=stride,
                       dilation=dil, padding=pad))
    ref1 = _reference(x1, params1, kernel_size=ksz, dilation=dil, padding=pad)
    assert out1.shape == ref1.shape == (B, Cout, L), (out1.shape, ref1.shape)
    assert jnp.allclose(out1, ref1, atol=1e-3, rtol=1e-3), float(
        jnp.max(jnp.abs(out1 - ref1)))

    # Config 2: C_in == C_out  -> identity residual path.
    Cin2 = Cout2 = 32
    params2 = _make_params(k_p2, Cin2, Cout2, ksz, downsample=False)
    x2 = jax.random.normal(k_x2, (B, Cin2, L), dtype=jnp.float32)
    out2 = jax.block_until_ready(
        temporal_block(x2, params2, kernel_size=ksz, stride=stride,
                       dilation=dil, padding=pad))
    ref2 = _reference(x2, params2, kernel_size=ksz, dilation=dil, padding=pad)
    assert out2.shape == ref2.shape == (B, Cout2, L), (out2.shape, ref2.shape)
    assert jnp.allclose(out2, ref2, atol=1e-3, rtol=1e-3), float(
        jnp.max(jnp.abs(out2 - ref2)))

    # TODO(synk): dropout is identity at inference; training-mode dropout and
    # training-mode BatchNorm batch statistics are not implemented.
    print("KERNEL_OK")
</pallas_src>

<mosaic_0001>
module attributes {stable_mosaic.version = 11 : i64} {
  func.func @_temporal_block_kernel(%arg0: i32, %arg1: memref<1x48x16xf32, #tpu.memory_space<vmem>>, %arg2: memref<3x16x32xf32, #tpu.memory_space<vmem>>, %arg3: memref<1x32xf32, #tpu.memory_space<vmem>>, %arg4: memref<3x32x32xf32, #tpu.memory_space<vmem>>, %arg5: memref<1x32xf32, #tpu.memory_space<vmem>>, %arg6: memref<16x32xf32, #tpu.memory_space<vmem>>, %arg7: memref<1x32xf32, #tpu.memory_space<vmem>>, %arg8: memref<1x48x32xf32, #tpu.memory_space<vmem>>) attributes {dimension_semantics = [#tpu.dimension_semantics<parallel>], iteration_bounds = array<i64: 2>, scalar_prefetch = 0 : i64, scratch_operands = 0 : i64, tpu.core_type = #tpu.core_type<tc>, window_params = [{transform_indices = @transform_0, window_bounds = array<i64: 1, 48, 16>}, {pipeline_mode = #tpu.pipeline_mode<synchronous>, transform_indices = @transform_1, window_bounds = array<i64: 3, 16, 32>}, {pipeline_mode = #tpu.pipeline_mode<synchronous>, transform_indices = @transform_2, window_bounds = array<i64: 1, 32>}, {pipeline_mode = #tpu.pipeline_mode<synchronous>, transform_indices = @transform_3, window_bounds = array<i64: 3, 32, 32>}, {pipeline_mode = #tpu.pipeline_mode<synchronous>, transform_indices = @transform_4, window_bounds = array<i64: 1, 32>}, {pipeline_mode = #tpu.pipeline_mode<synchronous>, transform_indices = @transform_5, window_bounds = array<i64: 16, 32>}, {pipeline_mode = #tpu.pipeline_mode<synchronous>, transform_indices = @transform_6, window_bounds = array<i64: 1, 32>}, {transform_indices = @transform_7, window_bounds = array<i64: 1, 48, 32>}]} {
    %c0 = arith.constant 0 : index
    %c0_0 = arith.constant 0 : index
    %c0_1 = arith.constant 0 : index
    %0 = vector.load %arg1[%c0, %c0_0, %c0_1] : memref<1x48x16xf32, #tpu.memory_space<vmem>>, vector<1x48x16xf32>
    %1 = vector.shape_cast %0 : vector<1x48x16xf32> to vector<48x16xf32>
    %cst = arith.constant 0.000000e+00 : f32
    %2 = vector.broadcast %cst : f32 to vector<4x16xf32>
    %3 = tpu.concatenate %2, %1 in 0 : vector<4x16xf32>, vector<48x16xf32> -> vector<52x16xf32>
    %cst_2 = arith.constant 0.000000e+00 : f32
    %4 = vector.broadcast %cst_2 : f32 to vector<48x32xf32>
    %c0_3 = arith.constant 0 : index
    %c0_4 = arith.constant 0 : index
    %5 = vector.load %arg3[%c0_3, %c0_4] : memref<1x32xf32, #tpu.memory_space<vmem>>, vector<1x32xf32>
    %6 = vector.broadcast %5 : vector<1x32xf32> to vector<48x32xf32>
    %7 = arith.addf %4, %6 : vector<48x32xf32>
    %8 = vector.extract_strided_slice %3 {offsets = [0, 0], sizes = [48, 16], strides = [1, 1]} : vector<52x16xf32> to vector<48x16xf32>
    %c0_5 = arith.constant 0 : index
    %c0_6 = arith.constant 0 : index
    %c0_7 = arith.constant 0 : index
    %9 = vector.load %arg2[%c0_5, %c0_6, %c0_7] : memref<3x16x32xf32, #tpu.memory_space<vmem>>, vector<1x16x32xf32>
    %10 = vector.shape_cast %9 : vector<1x16x32xf32> to vector<16x32xf32>
    %cst_8 = arith.constant dense<0.000000e+00> : vector<48x32xf32>
    %11 = tpu.matmul %8, %10, %cst_8 {dimension_numbers = #tpu.dot_dimension_numbers<[1], [0], [0], [1], [0, 0, 1, 1], [], []>} : vector<48x16xf32>, vector<16x32xf32>, vector<48x32xf32> -> vector<48x32xf32>
    %12 = arith.addf %7, %11 : vector<48x32xf32>
    %13 = vector.extract_strided_slice %3 {offsets = [2, 0], sizes = [48, 16], strides = [1, 1]} : vector<52x16xf32> to vector<48x16xf32>
    %c1 = arith.constant 1 : index
    %c0_9 = arith.constant 0 : index
    %c0_10 = arith.constant 0 : index
    %14 = vector.load %arg2[%c1, %c0_9, %c0_10] : memref<3x16x32xf32, #tpu.memory_space<vmem>>, vector<1x16x32xf32>
    %15 = vector.shape_cast %14 : vector<1x16x32xf32> to vector<16x32xf32>
    %cst_11 = arith.constant dense<0.000000e+00> : vector<48x32xf32>
    %16 = tpu.matmul %13, %15, %cst_11 {dimension_numbers = #tpu.dot_dimension_numbers<[1], [0], [0], [1], [0, 0, 1, 1], [], []>} : vector<48x16xf32>, vector<16x32xf32>, vector<48x32xf32> -> vector<48x32xf32>
    %17 = arith.addf %12, %16 : vector<48x32xf32>
    %18 = vector.extract_strided_slice %3 {offsets = [4, 0], sizes = [48, 16], strides = [1, 1]} : vector<52x16xf32> to vector<48x16xf32>
    %c2 = arith.constant 2 : index
    %c0_12 = arith.constant 0 : index
    %c0_13 = arith.constant 0 : index
    %19 = vector.load %arg2[%c2, %c0_12, %c0_13] : memref<3x16x32xf32, #tpu.memory_space<vmem>>, vector<1x16x32xf32>
    %20 = vector.shape_cast %19 : vector<1x16x32xf32> to vector<16x32xf32>
    %cst_14 = arith.constant dense<0.000000e+00> : vector<48x32xf32>
    %21 = tpu.matmul %18, %20, %cst_14 {dimension_numbers = #tpu.dot_dimension_numbers<[1], [0], [0], [1], [0, 0, 1, 1], [], []>} : vector<48x16xf32>, vector<16x32xf32>, vector<48x32xf32> -> vector<48x32xf32>
    %22 = arith.addf %17, %21 : vector<48x32xf32>
    %cst_15 = arith.constant 0.000000e+00 : f32
    %23 = vector.broadcast %cst_15 : f32 to vector<48x32xf32>
    %24 = arith.maximumf %22, %23 : vector<48x32xf32>
    %cst_16 = arith.constant 0.000000e+00 : f32
    %25 = vector.broadcast %cst_16 : f32 to vector<4x32xf32>
    %26 = tpu.concatenate %25, %24 in 0 : vector<4x32xf32>, vector<48x32xf32> -> vector<52x32xf32>
    %cst_17 = arith.constant 0.000000e+00 : f32
    %27 = vector.broadcast %cst_17 : f32 to vector<48x32xf32>
    %c0_18 = arith.constant 0 : index
    %c0_19 = arith.constant 0 : index
    %28 = vector.load %arg5[%c0_18, %c0_19] : memref<1x32xf32, #tpu.memory_space<vmem>>, vector<1x32xf32>
    %29 = vector.broadcast %28 : vector<1x32xf32> to vector<48x32xf32>
    %30 = arith.addf %27, %29 : vector<48x32xf32>
    %31 = vector.extract_strided_slice %26 {offsets = [0, 0], sizes = [48, 32], strides = [1, 1]} : vector<52x32xf32> to vector<48x32xf32>
    %c0_20 = arith.constant 0 : index
    %c0_21 = arith.constant 0 : index
    %c0_22 = arith.constant 0 : index
    %32 = vector.load %arg4[%c0_20, %c0_21, %c0_22] : memref<3x32x32xf32, #tpu.memory_space<vmem>>, vector<1x32x32xf32>
    %33 = vector.shape_cast %32 : vector<1x32x32xf32> to vector<32x32xf32>
    %cst_23 = arith.constant dense<0.000000e+00> : vector<48x32xf32>
    %34 = tpu.matmul %31, %33, %cst_23 {dimension_numbers = #tpu.dot_dimension_numbers<[1], [0], [0], [1], [0, 0, 1, 1], [], []>} : vector<48x32xf32>, vector<32x32xf32>, vector<48x32xf32> -> vector<48x32xf32>
    %35 = arith.addf %30, %34 : vector<48x32xf32>
    %36 = vector.extract_strided_slice %26 {offsets = [2, 0], sizes = [48, 32], strides = [1, 1]} : vector<52x32xf32> to vector<48x32xf32>
    %c1_24 = arith.constant 1 : index
    %c0_25 = arith.constant 0 : index
    %c0_26 = arith.constant 0 : index
    %37 = vector.load %arg4[%c1_24, %c0_25, %c0_26] : memref<3x32x32xf32, #tpu.memory_space<vmem>>, vector<1x32x32xf32>
    %38 = vector.shape_cast %37 : vector<1x32x32xf32> to vector<32x32xf32>
    %cst_27 = arith.constant dense<0.000000e+00> : vector<48x32xf32>
    %39 = tpu.matmul %36, %38, %cst_27 {dimension_numbers = #tpu.dot_dimension_numbers<[1], [0], [0], [1], [0, 0, 1, 1], [], []>} : vector<48x32xf32>, vector<32x32xf32>, vector<48x32xf32> -> vector<48x32xf32>
    %40 = arith.addf %35, %39 : vector<48x32xf32>
    %41 = vector.extract_strided_slice %26 {offsets = [4, 0], sizes = [48, 32], strides = [1, 1]} : vector<52x32xf32> to vector<48x32xf32>
    %c2_28 = arith.constant 2 : index
    %c0_29 = arith.constant 0 : index
    %c0_30 = arith.constant 0 : index
    %42 = vector.load %arg4[%c2_28, %c0_29, %c0_30] : memref<3x32x32xf32, #tpu.memory_space<vmem>>, vector<1x32x32xf32>
    %43 = vector.shape_cast %42 : vector<1x32x32xf32> to vector<32x32xf32>
    %cst_31 = arith.constant dense<0.000000e+00> : vector<48x32xf32>
    %44 = tpu.matmul %41, %43, %cst_31 {dimension_numbers = #tpu.dot_dimension_numbers<[1], [0], [0], [1], [0, 0, 1, 1], [], []>} : vector<48x32xf32>, vector<32x32xf32>, vector<48x32xf32> -> vector<48x32xf32>
    %45 = arith.addf %40, %44 : vector<48x32xf32>
    %cst_32 = arith.constant 0.000000e+00 : f32
    %46 = vector.broadcast %cst_32 : f32 to vector<48x32xf32>
    %47 = arith.maximumf %45, %46 : vector<48x32xf32>
    %c0_33 = arith.constant 0 : index
    %c0_34 = arith.constant 0 : index
    %48 = vector.load %arg6[%c0_33, %c0_34] : memref<16x32xf32, #tpu.memory_space<vmem>>, vector<16x32xf32>
    %cst_35 = arith.constant dense<0.000000e+00> : vector<48x32xf32>
    %49 = tpu.matmul %1, %48, %cst_35 {dimension_numbers = #tpu.dot_dimension_numbers<[1], [0], [0], [1], [0, 0, 1, 1], [], []>} : vector<48x16xf32>, vector<16x32xf32>, vector<48x32xf32> -> vector<48x32xf32>
    %c0_36 = arith.constant 0 : index
    %c0_37 = arith.constant 0 : index
    %50 = vector.load %arg7[%c0_36, %c0_37] : memref<1x32xf32, #tpu.memory_space<vmem>>, vector<1x32xf32>
    %51 = vector.broadcast %50 : vector<1x32xf32> to vector<48x32xf32>
    %52 = arith.addf %49, %51 : vector<48x32xf32>
    %53 = arith.addf %47, %52 : vector<48x32xf32>
    %cst_38 = arith.constant 0.000000e+00 : f32
    %54 = vector.broadcast %cst_38 : f32 to vector<48x32xf32>
    %55 = arith.cmpf ogt, %53, %54 : vector<48x32xf32>
    %cst_39 = arith.constant 3.000000e-01 : f32
    %56 = vector.broadcast %cst_39 : f32 to vector<48x32xf32>
    %57 = arith.mulf %56, %53 : vector<48x32xf32>
    %58 = arith.select %55, %53, %57 : vector<48x32xi1>, vector<48x32xf32>
    %c0_40 = arith.constant 0 : index
    %c0_41 = arith.constant 0 : index
    %c0_42 = arith.constant 0 : index
    %59 = vector.load %arg8[%c0_40, %c0_41, %c0_42] : memref<1x48x32xf32, #tpu.memory_space<vmem>>, vector<1x48x32xf32>
    %60 = vector.shape_cast %59 : vector<1x48x32xf32> to vector<48x32xf32>
    %61 = vector.shape_cast %58 : vector<48x32xf32> to vector<1x48x32xf32>
    tpu.vector_store %arg8[%c0_40, %c0_41, %c0_42], %61 {strides = array<i32>} : memref<1x48x32xf32, #tpu.memory_space<vmem>>, vector<1x48x32xf32>,
    return
  }
  func.func @transform_0(%arg0: i32) -> (i32, i32, i32) {
    %c0_i32 = arith.constant 0 : i32
    %c0_i32_0 = arith.constant 0 : i32
    %c0_i32_1 = arith.constant 0 : i32
    return %arg0, %c0_i32, %c0_i32_0 : i32, i32, i32
  }
  func.func @transform_1(%arg0: i32) -> (i32, i32, i32) {
    %c0_i32 = arith.constant 0 : i32
    %c0_i32_0 = arith.constant 0 : i32
    %c0_i32_1 = arith.constant 0 : i32
    %c0_i32_2 = arith.constant 0 : i32
    return %c0_i32, %c0_i32_0, %c0_i32_1 : i32, i32, i32
  }
  func.func @transform_2(%arg0: i32) -> (i32, i32) {
    %c0_i32 = arith.constant 0 : i32
    %c0_i32_0 = arith.constant 0 : i32
    %c0_i32_1 = arith.constant 0 : i32
    return %c0_i32, %c0_i32_0 : i32, i32
  }
  func.func @transform_3(%arg0: i32) -> (i32, i32, i32) {
    %c0_i32 = arith.constant 0 : i32
    %c0_i32_0 = arith.constant 0 : i32
    %c0_i32_1 = arith.constant 0 : i32
    %c0_i32_2 = arith.constant 0 : i32
    return %c0_i32, %c0_i32_0, %c0_i32_1 : i32, i32, i32
  }
  func.func @transform_4(%arg0: i32) -> (i32, i32) {
    %c0_i32 = arith.constant 0 : i32
    %c0_i32_0 = arith.constant 0 : i32
    %c0_i32_1 = arith.constant 0 : i32
    return %c0_i32, %c0_i32_0 : i32, i32
  }
  func.func @transform_5(%arg0: i32) -> (i32, i32) {
    %c0_i32 = arith.constant 0 : i32
    %c0_i32_0 = arith.constant 0 : i32
    %c0_i32_1 = arith.constant 0 : i32
    return %c0_i32, %c0_i32_0 : i32, i32
  }
  func.func @transform_6(%arg0: i32) -> (i32, i32) {
    %c0_i32 = arith.constant 0 : i32
    %c0_i32_0 = arith.constant 0 : i32
    %c0_i32_1 = arith.constant 0 : i32
    return %c0_i32, %c0_i32_0 : i32, i32
  }
  func.func @transform_7(%arg0: i32) -> (i32, i32, i32) {
    %c0_i32 = arith.constant 0 : i32
    %c0_i32_0 = arith.constant 0 : i32
    %c0_i32_1 = arith.constant 0 : i32
    return %arg0, %c0_i32, %c0_i32_0 : i32, i32, i32
  }
}

</mosaic_0001>

<llo_original>
// kernel: tpu_custom_call.1
$region0: #{tpu_custom_call.1}
  #allocation0 [shape = 'u32[]', space=smem, size = 0x4, offset = 0x4, fixed_abs, tag = 'smem constant byte address 0x4 - core index']
  #allocation1 [shape = 'u32[72,128]{1,0:T(1,128)}', space=vmem, size = 0x9000, scoped, tag = 'internal scratch']
  %s0 = inlined_call_operand.vmem [shape: f32[2,48,16], index: 0, kind: input, shape index: {}]
  %s1 = inlined_call_operand.hbm [shape: f32[3,16,32], index: 1, kind: input, shape index: {}]
  %s2 = inlined_call_operand.vmem [shape: f32[1,32], index: 2, kind: input, shape index: {}]
  %s3 = inlined_call_operand.vmem [shape: f32[3,32,32], index: 3, kind: input, shape index: {}]
  %s4 = inlined_call_operand.vmem [shape: f32[1,32], index: 4, kind: input, shape index: {}]
  %s5 = inlined_call_operand.vmem [shape: f32[16,32], index: 5, kind: input, shape index: {}]
  %s6 = inlined_call_operand.vmem [shape: f32[1,32], index: 6, kind: input, shape index: {}]
  %s7 = inlined_call_operand.vmem [shape: f32[2,48,32], index: 7, kind: output, shape index: {}]
  %s8 = sld [smem:[#allocation0]]
  $region65: #{tpu_custom_call.1} parent=0
    _
  %s10 = ssub.s32 1, %s8
  %s11 = scalar_select 0, %s10, %s8
  $region1: #{tpu_custom_call.1} parent=0
    #allocation2 [shape = 'u8[24576]{0}', space=vmem, size = 0x6000, scoped, tag = 'input window, operand 1, single buffered']
    #allocation3 [shape = 's32[2]{0}', space=sflag, size = 0x8, scoped, tag = 'scoped memory for tpu_custom_call.1']
    %12 = vsyncpa [#allocation3], 0
    loop: start=0, step=1, limit=4
    $region2: #{tpu_custom_call.1} parent=1 // loop_pre_header
      _
    $region3: #{tpu_custom_call.1} parent=1 // loop_header
      %s14 = sphi 0, %s18
      %p15 = scmp.ge.s32.totalorder %s14, 4
      %s24 = sphi 0, %s26
      %s27 = sphi 0, %s24
      %s28 = sphi 0, %s27
      %s44 = sphi 0, %s28
      %s48 = sphi 0, %s48
      %s50 = sphi 0, %s48
      %s51 = sphi 0, %s50
      %s65 = sphi 0, %s51
      %s69 = sphi 0, %s69
      %s71 = sphi 0, %s69
      %s72 = sphi 0, %s71
      %s86 = sphi 0, %s72
      %s90 = sphi 0, %s90
      %s92 = sphi 0, %s90
      %s93 = sphi 0, %s92
      %s107 = sphi 0, %s93
      %s111 = sphi 0, %s111
      %s113 = sphi 0, %s111
      %s114 = sphi 0, %s113
      %s128 = sphi 0, %s114
      %s132 = sphi 0, %s132
      %s134 = sphi 0, %s132
      %s135 = sphi 0, %s134
      %s149 = sphi 0, %s135
      %s153 = sphi 0, %s153
      %s155 = sphi 0, %s153
      %s156 = sphi 0, %s155
      %s170 = sphi 0, %s156
      %s176 = sphi 0, %s178
      %s179 = sphi 0, %s176
      %s180 = sphi 0, %s179
      %s196 = sphi 0, %s180
    $region4: #{tpu_custom_call.1} parent=1 // loop_header_branch
      %17 = sbr.rel (%p15) target = $region8
    $region5: #{tpu_custom_call.1} parent=1 // loop_body
      %s19 = ssub.s32 %s14, 1
      %s20 = ssub.s32 %s14, 2
      %s21 = sadd.s32 %s14, 1
      %s22 = ssub.s32 %s14, %s21
      %p23 = scmp.eq.s32.totalorder %s22, 0
      %s25 = sadd.s32 %s24, 1
      %s26 = scalar_select %p23, %s24, %s25
      %p29 = pneg %p23
      %p30 = scmp.eq.s32.totalorder %s14, 1
      %p31 = por %p29, %p30
      %p32 = scmp.ne.s32.totalorder %s24, %s27
      %p33 = scmp.eq.s32.totalorder %s14, 0
      %p34 = por %p32, %p33
      %p35 = scmp.ne.s32.totalorder %s24, %s27
      %p36 = scmp.eq.s32.totalorder %s19, 1
      %p37 = por %p35, %p36
      %p38 = scmp.ne.s32.totalorder %s27, %s28
      %p39 = scmp.eq.s32.totalorder %s19, 0
      %p40 = por %p38, %p39
      %p41 = scmp.ne.s32.totalorder %s27, %s28
      %p42 = scmp.eq.s32.totalorder %s20, 1
      %p43 = por %p41, %p42
      %p45 = scmp.ne.s32.totalorder %s28, %s44
      %p46 = scmp.eq.s32.totalorder %s20, 0
      %p47 = por %p45, %p46
      %s49 = sadd.s32 %s48, 1
      %p52 = scmp.eq.s32.totalorder %s14, 1
      %p53 = scmp.ne.s32.totalorder %s48, %s50
      %p54 = scmp.eq.s32.totalorder %s14, 0
      %p55 = por %p53, %p54
      %p56 = scmp.ne.s32.totalorder %s48, %s50
      %p57 = scmp.eq.s32.totalorder %s19, 1
      %p58 = por %p56, %p57
      %p59 = scmp.ne.s32.totalorder %s50, %s51
      %p60 = scmp.eq.s32.totalorder %s19, 0
      %p61 = por %p59, %p60
      %p62 = scmp.ne.s32.totalorder %s50, %s51
      %p63 = scmp.eq.s32.totalorder %s20, 1
      %p64 = por %p62, %p63
      %p66 = scmp.ne.s32.totalorder %s51, %s65
      %p67 = scmp.eq.s32.totalorder %s20, 0
      %p68 = por %p66, %p67
      %s70 = sadd.s32 %s69, 1
      %p73 = scmp.eq.s32.totalorder %s14, 1
      %p74 = scmp.ne.s32.totalorder %s69, %s71
      %p75 = scmp.eq.s32.totalorder %s14, 0
      %p76 = por %p74, %p75
      %p77 = scmp.ne.s32.totalorder %s69, %s71
      %p78 = scmp.eq.s32.totalorder %s19, 1
      %p79 = por %p77, %p78
      %p80 = scmp.ne.s32.totalorder %s71, %s72
      %p81 = scmp.eq.s32.totalorder %s19, 0
      %p82 = por %p80, %p81
      %p83 = scmp.ne.s32.totalorder %s71, %s72
      %p84 = scmp.eq.s32.totalorder %s20, 1
      %p85 = por %p83, %p84
      %p87 = scmp.ne.s32.totalorder %s72, %s86
      %p88 = scmp.eq.s32.totalorder %s20, 0
      %p89 = por %p87, %p88
      %s91 = sadd.s32 %s90, 1
      %p94 = scmp.eq.s32.totalorder %s14, 1
      %p95 = scmp.ne.s32.totalorder %s90, %s92
      %p96 = scmp.eq.s32.totalorder %s14, 0
      %p97 = por %p95, %p96
      %p98 = scmp.ne.s32.totalorder %s90, %s92
      %p99 = scmp.eq.s32.totalorder %s19, 1
      %p100 = por %p98, %p99
      %p101 = scmp.ne.s32.totalorder %s92, %s93
      %p102 = scmp.eq.s32.totalorder %s19, 0
      %p103 = por %p101, %p102
      %p104 = scmp.ne.s32.totalorder %s92, %s93
      %p105 = scmp.eq.s32.totalorder %s20, 1
      %p106 = por %p104, %p105
      %p108 = scmp.ne.s32.totalorder %s93, %s107
      %p109 = scmp.eq.s32.totalorder %s20, 0
      %p110 = por %p108, %p109
      %s112 = sadd.s32 %s111, 1
      %p115 = scmp.eq.s32.totalorder %s14, 1
      %p116 = scmp.ne.s32.totalorder %s111, %s113
      %p117 = scmp.eq.s32.totalorder %s14, 0
      %p118 = por %p116, %p117
      %p119 = scmp.ne.s32.totalorder %s111, %s113
      %p120 = scmp.eq.s32.totalorder %s19, 1
      %p121 = por %p119, %p120
      %p122 = scmp.ne.s32.totalorder %s113, %s114
      %p123 = scmp.eq.s32.totalorder %s19, 0
      %p124 = por %p122, %p123
      %p125 = scmp.ne.s32.totalorder %s113, %s114
      %p126 = scmp.eq.s32.totalorder %s20, 1
      %p127 = por %p125, %p126
      %p129 = scmp.ne.s32.totalorder %s114, %s128
      %p130 = scmp.eq.s32.totalorder %s20, 0
      %p131 = por %p129, %p130
      %s133 = sadd.s32 %s132, 1
      %p136 = scmp.eq.s32.totalorder %s14, 1
      %p137 = scmp.ne.s32.totalorder %s132, %s134
      %p138 = scmp.eq.s32.totalorder %s14, 0
      %p139 = por %p137, %p138
      %p140 = scmp.ne.s32.totalorder %s132, %s134
      %p141 = scmp.eq.s32.totalorder %s19, 1
      %p142 = por %p140, %p141
      %p143 = scmp.ne.s32.totalorder %s134, %s135
      %p144 = scmp.eq.s32.totalorder %s19, 0
      %p145 = por %p143, %p144
      %p146 = scmp.ne.s32.totalorder %s134, %s135
      %p147 = scmp.eq.s32.totalorder %s20, 1
      %p148 = por %p146, %p147
      %p150 = scmp.ne.s32.totalorder %s135, %s149
      %p151 = scmp.eq.s32.totalorder %s20, 0
      %p152 = por %p150, %p151
      %s154 = sadd.s32 %s153, 1
      %p157 = scmp.eq.s32.totalorder %s14, 1
      %p158 = scmp.ne.s32.totalorder %s153, %s155
      %p159 = scmp.eq.s32.totalorder %s14, 0
      %p160 = por %p158, %p159
      %p161 = scmp.ne.s32.totalorder %s153, %s155
      %p162 = scmp.eq.s32.totalorder %s19, 1
      %p163 = por %p161, %p162
      %p164 = scmp.ne.s32.totalorder %s155, %s156
      %p165 = scmp.eq.s32.totalorder %s19, 0
      %p166 = por %p164, %p165
      %p167 = scmp.ne.s32.totalorder %s155, %s156
      %p168 = scmp.eq.s32.totalorder %s20, 1
      %p169 = por %p167, %p168
      %p171 = scmp.ne.s32.totalorder %s156, %s170
      %p172 = scmp.eq.s32.totalorder %s20, 0
      %p173 = por %p171, %p172
      %s174 = ssub.s32 %s14, %s21
      %p175 = scmp.eq.s32.totalorder %s174, 0
      %s177 = sadd.s32 %s176, 1
      %s178 = scalar_select %p175, %s176, %s177
      %p181 = pneg %p175
      %p182 = scmp.eq.s32.totalorder %s14, 1
      %p183 = por %p181, %p182
      %p184 = scmp.ne.s32.totalorder %s176, %s179
      %p185 = scmp.eq.s32.totalorder %s14, 0
      %p186 = por %p184, %p185
      %p187 = scmp.ne.s32.totalorder %s176, %s179
      %p188 = scmp.eq.s32.totalorder %s19, 1
      %p189 = por %p187, %p188
      %p190 = scmp.ne.s32.totalorder %s179, %s180
      %p191 = scmp.eq.s32.totalorder %s19, 0
      %p192 = por %p190, %p191
      %p193 = scmp.ne.s32.totalorder %s179, %s180
      %p194 = scmp.eq.s32.totalorder %s20, 1
      %p195 = por %p193, %p194
      %p197 = scmp.ne.s32.totalorder %s180, %s196
      %p198 = scmp.eq.s32.totalorder %s20, 0
      %p199 = por %p197, %p198
      %p200 = scmp.le.s32.totalorder 1, %s14
      %p201 = scmp.lt.s32.totalorder %s14, 3
      %p202 = pnand %p200, %p201
      %p203 = pneg %p202
      // Predicated region
      $region9: #{tpu_custom_call.1} parent=5 // pred_check
        _
      $region10: #{tpu_custom_call.1} parent=5 // pred_check_branch
        %205 = sbr.rel (%p202) target = $region12
      $region11: #{tpu_custom_call.1} parent=5 // pred_region
        %s206 = ssub.s32 %s14, 1
        // Predicated region
        $region13: #{tpu_custom_call.1} parent=11 // pred_check
          %p207 = pneg %p61
        $region14: #{tpu_custom_call.1} parent=11 // pred_check_branch
          %209 = sbr.rel (%p207) target = $region16
        $region15: #{tpu_custom_call.1} parent=11 // pred_region
          %211 = vsyncadd [#allocation3], 0
          %s212 = sshll.u32 %s1, 4
          %s213 = int_to_ptr.hbm [resolvable:$true] %s212
          %s214 = sshll.u32 [#allocation2], 4
          %s215 = int_to_ptr.vmem [resolvable:$true] %s214
          %220 = dma.hbm_to_vmem [thread:$0]  %s213, 768, %s215, [#allocation3], 128, 128, 8
        $region16: #{tpu_custom_call.1} parent=11 // pred_fallthru
          _
        // Predicated region
        $region17: #{tpu_custom_call.1} parent=11 // pred_check
          %p221 = pneg %p82
        $region18: #{tpu_custom_call.1} parent=11 // pred_check_branch
          %223 = sbr.rel (%p221) target = $region20
        $region19: #{tpu_custom_call.1} parent=11 // pred_region
          _
        $region20: #{tpu_custom_call.1} parent=11 // pred_fallthru
          _
        // Predicated region
        $region21: #{tpu_custom_call.1} parent=11 // pred_check
          %p224 = pneg %p103
        $region22: #{tpu_custom_call.1} parent=11 // pred_check_branch
          %226 = sbr.rel (%p224) target = $region24
        $region23: #{tpu_custom_call.1} parent=11 // pred_region
          _
        $region24: #{tpu_custom_call.1} parent=11 // pred_fallthru
          _
        // Predicated region
        $region25: #{tpu_custom_call.1} parent=11 // pred_check
          %p227 = pneg %p124
        $region26: #{tpu_custom_call.1} parent=11 // pred_check_branch
          %229 = sbr.rel (%p227) target = $region28
        $region27: #{tpu_custom_call.1} parent=11 // pred_region
          _
        $region28: #{tpu_custom_call.1} parent=11 // pred_fallthru
          _
        // Predicated region
        $region29: #{tpu_custom_call.1} parent=11 // pred_check
          %p230 = pneg %p145
        $region30: #{tpu_custom_call.1} parent=11 // pred_check_branch
          %232 = sbr.rel (%p230) target = $region32
        $region31: #{tpu_custom_call.1} parent=11 // pred_region
          _
        $region32: #{tpu_custom_call.1} parent=11 // pred_fallthru
          _
        // Predicated region
        $region33: #{tpu_custom_call.1} parent=11 // pred_check
          %p233 = pneg %p166
        $region34: #{tpu_custom_call.1} parent=11 // pred_check_branch
          %235 = sbr.rel (%p233) target = $region36
        $region35: #{tpu_custom_call.1} parent=11 // pred_region
          _
        $region36: #{tpu_custom_call.1} parent=11 // pred_fallthru
          _
      $region12: #{tpu_custom_call.1} parent=5 // pred_fallthru
        _
      %p236 = scmp.lt.s32.totalorder %s14, 2
      // Predicated region
      $region37: #{tpu_custom_call.1} parent=5 // pred_check
        %p237 = pneg %p236
      $region38: #{tpu_custom_call.1} parent=5 // pred_check_branch
        %239 = sbr.rel (%p237) target = $region40
      $region39: #{tpu_custom_call.1} parent=5 // pred_region
        // Predicated region
        $region41: #{tpu_custom_call.1} parent=39 // pred_check
          %p240 = pneg %p34
        $region42: #{tpu_custom_call.1} parent=39 // pred_check_branch
          %242 = sbr.rel (%p240) target = $region44
        $region43: #{tpu_custom_call.1} parent=39 // pred_region
          %p243 = scmp.lt.s32.totalorder %s14, 1
          %s244 = scalar_select %p243, %s14, 1
          %s245 = smul.addr %s244, 6
          %s246 = smul.addr %s245, 8
          %s247 = scalar_lea.vmem %s0, %s246
        $region44: #{tpu_custom_call.1} parent=39 // pred_fallthru
          _
      $region40: #{tpu_custom_call.1} parent=5 // pred_fallthru
        _
      %p248 = scmp.le.s32.totalorder 1, %s14
      %p249 = scmp.lt.s32.totalorder %s14, 3
      %p250 = pnand %p248, %p249
      %p251 = pneg %p250
      // Predicated region
      $region45: #{tpu_custom_call.1} parent=5 // pred_check
        _
      $region46: #{tpu_custom_call.1} parent=5 // pred_check_branch
        %253 = sbr.rel (%p250) target = $region48
      $region47: #{tpu_custom_call.1} parent=5 // pred_region
        %s254 = ssub.s32 %s14, 1
        // Predicated region
        $region49: #{tpu_custom_call.1} parent=47 // pred_check
          %p255 = pneg %p61
        $region50: #{tpu_custom_call.1} parent=47 // pred_check_branch
          %257 = sbr.rel (%p255) target = $region52
        $region51: #{tpu_custom_call.1} parent=47 // pred_region
          %259 = dma.done [#allocation3], 768
        $region52: #{tpu_custom_call.1} parent=47 // pred_fallthru
          _
        %p260 = scmp.lt.s32.totalorder %s19, 1
        %s261 = scalar_select %p260, %s19, 1
        %s262 = smul.addr %s261, 6
        %s263 = smul.addr %s262, 8
        %s264 = scalar_lea.vmem %s0, %s263
        %p265 = pneg %p40
        %p266 = pneg %p37
        %p267 = pneg %p61
        %p268 = pneg %p58
        %p269 = pneg %p82
        %p270 = pneg %p79
        %p271 = pneg %p103
        %p272 = pneg %p100
        %p273 = pneg %p124
        %p274 = pneg %p121
        %p275 = pneg %p145
        %p276 = pneg %p142
        %p277 = pneg %p166
        %p278 = pneg %p163
        %p279 = pneg %p192
        %p280 = pneg %p189
        %p281 = scmp.lt.s32.totalorder %s19, 1
        %s282 = scalar_select %p281, %s19, 1
        %s283 = smul.addr %s282, 6
        %s284 = smul.addr %s283, 8
        %s285 = scalar_lea.vmem %s7, %s284
        %p286 = scmp.lt.s32.totalorder %s19, 1
        %s287 = scalar_select %p286, %s19, 1
        %s288 = smul.addr %s287, 6
        %s289 = smul.addr %s288, 8
        %s290 = scalar_lea.vmem %s0, %s289
        %p291 = scmp.lt.s32.totalorder %s19, 1
        %s292 = scalar_select %p291, %s19, 1
        %s293 = smul.addr %s292, 6
        %s294 = smul.addr %s293, 8
        %s295 = scalar_lea.vmem %s7, %s294
        %v296 = vld [vmem:[%s290] sm:$0xff]
        %v297 = vld [vmem:[%s290 + $0x8] sm:$0xff]
        %v298 = vld [vmem:[%s290 + $0x10] sm:$0xff]
        %v299 = vld [vmem:[%s290 + $0x18] sm:$0xff]
        %v300 = vld [vmem:[%s290 + $0x20] sm:$0xff]
        %v301 = vld [vmem:[%s290 + $0x28] sm:$0xff]
        %vm308 = vcmask 1043456
        %v309 = vrot.slane %v296, 4
        %v310 = vrot.slane %v297, 4
        %v311 = vsel %vm308, %v309, %v310
        %v312 = vrot.slane %v298, 4
        %v313 = vsel %vm308, %v310, %v312
        %v314 = vrot.slane %v299, 4
        %v315 = vsel %vm308, %v312, %v314
        %v316 = vrot.slane %v300, 4
        %v317 = vsel %vm308, %v314, %v316
        %v318 = vrot.slane %v301, 4
        %v319 = vsel %vm308, %v316, %v318
        %v321 = vsel %vm308, 0.0, %v309
        %v322 = vld [vmem:[%s2] sm:$0x1]
        %v324 = vperm.slane %v322, 0
        %v326 = vadd.f32 %v324, 0.0
        %v327 = vld [vmem:[#allocation2] sm:$0xff]
        %v328 = vld [vmem:[#allocation2 + $0x8] sm:$0xff]
        %vm329 = vcmask 130048
        %v331 = vsel %vm329, %v321, 0
        %v333 = vsel %vm329, %v311, 0
        %v335 = vsel %vm329, %v313, 0
        %v337 = vsel %vm329, %v315, 0
        %v339 = vsel %vm329, %v317, 0
        %v341 = vsel %vm329, %v319, 0
        %343 = vmatpush.msra.mxu0 0.0
        %344 = vmatpush.msra.mxu0 0.0
        %345 = vmatpush.msra.mxu0 0.0
        %346 = vmatpush.msra.mxu0 0.0
        %347 = vmatpush.msra.mxu0 0.0
        %348 = vmatpush.msra.mxu0 0.0
        %349 = vmatpush.msra.mxu0 0.0
        %350 = vmatpush.msra.mxu0 0.0
        %351 = vmatpush.msra.mxu0 0.0
        %352 = vmatpush.msra.mxu0 0.0
        %353 = vmatpush.msra.mxu0 0.0
        %354 = vmatpush.msra.mxu0 0.0
        %355 = vmatpush.msra.mxu0 0.0
        %356 = vmatpush.msra.mxu0 0.0
        %357 = vmatpush.msra.mxu0 %v328
        %358 = vmatpush.msra.mxu0 %v327
        %359 = vmatmul.f32.gmra.mxu0 %v331
        %v360 = vpop.f32.mrf.mxu0
        %v361 = vadd.f32 0.0, %v360
        %362 = vmatmul.f32.gmra.mxu0 %v333
        %v363 = vpop.f32.mrf.mxu0
        %v364 = vadd.f32 0.0, %v363
        %365 = vmatmul.f32.gmra.mxu0 %v335
        %v366 = vpop.f32.mrf.mxu0
        %v367 = vadd.f32 0.0, %v366
        %368 = vmatmul.f32.gmra.mxu0 %v337
        %v369 = vpop.f32.mrf.mxu0
        %v370 = vadd.f32 0.0, %v369
        %371 = vmatmul.f32.gmra.mxu0 %v339
        %v372 = vpop.f32.mrf.mxu0
        %v373 = vadd.f32 0.0, %v372
        %374 = vmatmul.f32.gmra.mxu0 %v341
        %v375 = vpop.f32.mrf.mxu0
        %v376 = vadd.f32 0.0, %v375
        %377 = vdwg.mxu0
        %v378 = vadd.f32 %v326, %v361
        %v379 = vadd.f32 %v326, %v364
        %v380 = vadd.f32 %v326, %v367
        %v381 = vadd.f32 %v326, %v370
        %v382 = vadd.f32 %v326, %v373
        %v383 = vadd.f32 %v326, %v376
        %s384 = scalar_lea.vmem [#allocation2], 16
        %v385 = vld [vmem:[%s384] sm:$0xff]
        %v386 = vld [vmem:[%s384 + $0x8] sm:$0xff]
        %vm387 = vcmask 1045504
        %v388 = vrot.slane %v321, 2
        %v389 = vrot.slane %v311, 2
        %v390 = vsel %vm387, %v388, %v389
        %v391 = vrot.slane %v313, 2
        %v392 = vsel %vm387, %v389, %v391
        %v393 = vrot.slane %v315, 2
        %v394 = vsel %vm387, %v391, %v393
        %v395 = vrot.slane %v317, 2
        %v396 = vsel %vm387, %v393, %v395
        %v397 = vrot.slane %v319, 2
        %v398 = vsel %vm387, %v395, %v397
        %v399 = vrot.slane %v318, 2
        %v400 = vsel %vm387, %v397, %v399
        %v401 = vsel %vm329, %v390, 0
        %v403 = vsel %vm329, %v392, 0
        %v405 = vsel %vm329, %v394, 0
        %v407 = vsel %vm329, %v396, 0
        %v409 = vsel %vm329, %v398, 0
        %v411 = vsel %vm329, %v400, 0
        %413 = vmatpush.msra.mxu0 0.0
        %414 = vmatpush.msra.mxu0 0.0
        %415 = vmatpush.msra.mxu0 0.0
        %416 = vmatpush.msra.mxu0 0.0
        %417 = vmatpush.msra.mxu0 0.0
        %418 = vmatpush.msra.mxu0 0.0
        %419 = vmatpush.msra.mxu0 0.0
        %420 = vmatpush.msra.mxu0 0.0
        %421 = vmatpush.msra.mxu0 0.0
        %422 = vmatpush.msra.mxu0 0.0
        %423 = vmatpush.msra.mxu0 0.0
        %424 = vmatpush.msra.mxu0 0.0
        %425 = vmatpush.msra.mxu0 0.0
        %426 = vmatpush.msra.mxu0 0.0
        %427 = vmatpush.msra.mxu0 %v386
        %428 = vmatpush.msra.mxu0 %v385
        %429 = vmatmul.f32.gmra.mxu0 %v401
        %v430 = vpop.f32.mrf.mxu0
        %v431 = vadd.f32 0.0, %v430
        %432 = vmatmul.f32.gmra.mxu0 %v403
        %v433 = vpop.f32.mrf.mxu0
        %v434 = vadd.f32 0.0, %v433
        %435 = vmatmul.f32.gmra.mxu0 %v405
        %v436 = vpop.f32.mrf.mxu0
        %v437 = vadd.f32 0.0, %v436
        %438 = vmatmul.f32.gmra.mxu0 %v407
        %v439 = vpop.f32.mrf.mxu0
        %v440 = vadd.f32 0.0, %v439
        %441 = vmatmul.f32.gmra.mxu0 %v409
        %v442 = vpop.f32.mrf.mxu0
        %v443 = vadd.f32 0.0, %v442
        %444 = vmatmul.f32.gmra.mxu0 %v411
        %v445 = vpop.f32.mrf.mxu0
        %v446 = vadd.f32 0.0, %v445
        %447 = vdwg.mxu0
        %v448 = vadd.f32 %v378, %v431
        %v449 = vadd.f32 %v379, %v434
        %v450 = vadd.f32 %v380, %v437
        %v451 = vadd.f32 %v381, %v440
        %v452 = vadd.f32 %v382, %v443
        %v453 = vadd.f32 %v383, %v446
        %s454 = scalar_lea.vmem [#allocation2], 32
        %v455 = vld [vmem:[%s454] sm:$0xff]
        %v456 = vld [vmem:[%s454 + $0x8] sm:$0xff]
        %v457 = vrot.slane %v321, 4
        %v458 = vrot.slane %v311, 4
        %v459 = vsel %vm308, %v457, %v458
        %v460 = vrot.slane %v313, 4
        %v461 = vsel %vm308, %v458, %v460
        %v462 = vrot.slane %v315, 4
        %v463 = vsel %vm308, %v460, %v462
        %v464 = vrot.slane %v317, 4
        %v465 = vsel %vm308, %v462, %v464
        %v466 = vrot.slane %v319, 4
        %v467 = vsel %vm308, %v464, %v466
        %v468 = vrot.slane %v318, 4
        %v469 = vsel %vm308, %v466, %v468
        %v470 = vsel %vm329, %v459, 0
        %v472 = vsel %vm329, %v461, 0
        %v474 = vsel %vm329, %v463, 0
        %v476 = vsel %vm329, %v465, 0
        %v478 = vsel %vm329, %v467, 0
        %v480 = vsel %vm329, %v469, 0
        %482 = vmatpush.msra.mxu0 0.0
        %483 = vmatpush.msra.mxu0 0.0
        %484 = vmatpush.msra.mxu0 0.0
        %485 = vmatpush.msra.mxu0 0.0
        %486 = vmatpush.msra.mxu0 0.0
        %487 = vmatpush.msra.mxu0 0.0
        %488 = vmatpush.msra.mxu0 0.0
        %489 = vmatpush.msra.mxu0 0.0
        %490 = vmatpush.msra.mxu0 0.0
        %491 = vmatpush.msra.mxu0 0.0
        %492 = vmatpush.msra.mxu0 0.0
        %493 = vmatpush.msra.mxu0 0.0
        %494 = vmatpush.msra.mxu0 0.0
        %495 = vmatpush.msra.mxu0 0.0
        %496 = vmatpush.msra.mxu0 %v456
        %497 = vmatpush.msra.mxu0 %v455
        %498 = vmatmul.f32.gmra.mxu0 %v470
        %v499 = vpop.f32.mrf.mxu0
        %v500 = vadd.f32 0.0, %v499
        %501 = vmatmul.f32.gmra.mxu0 %v472
        %v502 = vpop.f32.mrf.mxu0
        %v503 = vadd.f32 0.0, %v502
        %504 = vmatmul.f32.gmra.mxu0 %v474
        %v505 = vpop.f32.mrf.mxu0
        %v506 = vadd.f32 0.0, %v505
        %507 = vmatmul.f32.gmra.mxu0 %v476
        %v508 = vpop.f32.mrf.mxu0
        %v509 = vadd.f32 0.0, %v508
        %510 = vmatmul.f32.gmra.mxu0 %v478
        %v511 = vpop.f32.mrf.mxu0
        %v512 = vadd.f32 0.0, %v511
        %513 = vmatmul.f32.gmra.mxu0 %v480
        %v514 = vpop.f32.mrf.mxu0
        %v515 = vadd.f32 0.0, %v514
        %516 = vdwg.mxu0
        %v517 = vadd.f32 %v448, %v500
        %v518 = vadd.f32 %v449, %v503
        %v519 = vadd.f32 %v450, %v506
        %v520 = vadd.f32 %v451, %v509
        %v521 = vadd.f32 %v452, %v512
        %v522 = vadd.f32 %v453, %v515
        %v523 = vmax.f32 %v517, 0.0
        %v524 = vmax.f32 %v518, 0.0
        %v525 = vmax.f32 %v519, 0.0
        %v526 = vmax.f32 %v520, 0.0
        %v527 = vmax.f32 %v521, 0.0
        %v528 = vmax.f32 %v522, 0.0
        %v535 = vrot.slane %v523, 4
        %v536 = vrot.slane %v524, 4
        %v537 = vsel %vm308, %v535, %v536
        %v538 = vrot.slane %v525, 4
        %v539 = vsel %vm308, %v536, %v538
        %v540 = vrot.slane %v526, 4
        %v541 = vsel %vm308, %v538, %v540
        %v542 = vrot.slane %v527, 4
        %v543 = vsel %vm308, %v540, %v542
        %v544 = vrot.slane %v528, 4
        %v545 = vsel %vm308, %v542, %v544
        %v547 = vsel %vm308, 0.0, %v535
        %v548 = vld [vmem:[%s4] sm:$0x1]
        %v550 = vperm.slane %v548, 0
        %v552 = vadd.f32 %v550, 0.0
        %v553 = vld [vmem:[%s3] sm:$0xff]
        %v554 = vld [vmem:[%s3 + $0x8] sm:$0xff]
        %v555 = vld [vmem:[%s3 + $0x10] sm:$0xff]
        %v556 = vld [vmem:[%s3 + $0x18] sm:$0xff]
        %vm557 = vcmask 261120
        %v559 = vsel %vm557, %v547, 0
        %v561 = vsel %vm557, %v537, 0
        %v563 = vsel %vm557, %v539, 0
        %v565 = vsel %vm557, %v541, 0
        %v567 = vsel %vm557, %v543, 0
        %v569 = vsel %vm557, %v545, 0
        %571 = vmatpush.msra.mxu0 0.0
        %572 = vmatpush.msra.mxu0 0.0
        %573 = vmatpush.msra.mxu0 0.0
        %574 = vmatpush.msra.mxu0 0.0
        %575 = vmatpush.msra.mxu0 0.0
        %576 = vmatpush.msra.mxu0 0.0
        %577 = vmatpush.msra.mxu0 0.0
        %578 = vmatpush.msra.mxu0 0.0
        %579 = vmatpush.msra.mxu0 0.0
        %580 = vmatpush.msra.mxu0 0.0
        %581 = vmatpush.msra.mxu0 0.0
        %582 = vmatpush.msra.mxu0 0.0
        %583 = vmatpush.msra.mxu0 %v556
        %584 = vmatpush.msra.mxu0 %v555
        %585 = vmatpush.msra.mxu0 %v554
        %586 = vmatpush.msra.mxu0 %v553
        %587 = vmatmul.f32.gmra.mxu0 %v559
        %v588 = vpop.f32.mrf.mxu0
        %v589 = vadd.f32 0.0, %v588
        %590 = vmatmul.f32.gmra.mxu0 %v561
        %v591 = vpop.f32.mrf.mxu0
        %v592 = vadd.f32 0.0, %v591
        %593 = vmatmul.f32.gmra.mxu0 %v563
        %v594 = vpop.f32.mrf.mxu0
        %v595 = vadd.f32 0.0, %v594
        %596 = vmatmul.f32.gmra.mxu0 %v565
        %v597 = vpop.f32.mrf.mxu0
        %v598 = vadd.f32 0.0, %v597
        %599 = vmatmul.f32.gmra.mxu0 %v567
        %v600 = vpop.f32.mrf.mxu0
        %v601 = vadd.f32 0.0, %v600
        %602 = vmatmul.f32.gmra.mxu0 %v569
        %v603 = vpop.f32.mrf.mxu0
        %v604 = vadd.f32 0.0, %v603
        %605 = vdwg.mxu0
        %v606 = vadd.f32 %v552, %v589
        %v607 = vadd.f32 %v552, %v592
        %v608 = vadd.f32 %v552, %v595
        %v609 = vadd.f32 %v552, %v598
        %v610 = vadd.f32 %v552, %v601
        %v611 = vadd.f32 %v552, %v604
        %s612 = scalar_lea.vmem %s3, 32
        %v613 = vld [vmem:[%s612] sm:$0xff]
        %v614 = vld [vmem:[%s612 + $0x8] sm:$0xff]
        %v615 = vld [vmem:[%s612 + $0x10] sm:$0xff]
        %v616 = vld [vmem:[%s612 + $0x18] sm:$0xff]
        %v617 = vrot.slane %v547, 2
        %v618 = vrot.slane %v537, 2
        %v619 = vsel %vm387, %v617, %v618
        %v620 = vrot.slane %v539, 2
        %v621 = vsel %vm387, %v618, %v620
        %v622 = vrot.slane %v541, 2
        %v623 = vsel %vm387, %v620, %v622
        %v624 = vrot.slane %v543, 2
        %v625 = vsel %vm387, %v622, %v624
        %v626 = vrot.slane %v545, 2
        %v627 = vsel %vm387, %v624, %v626
        %v628 = vrot.slane %v544, 2
        %v629 = vsel %vm387, %v626, %v628
        %v630 = vsel %vm557, %v619, 0
        %v632 = vsel %vm557, %v621, 0
        %v634 = vsel %vm557, %v623, 0
        %v636 = vsel %vm557, %v625, 0
        %v638 = vsel %vm557, %v627, 0
        %v640 = vsel %vm557, %v629, 0
        %642 = vmatpush.msra.mxu0 0.0
        %643 = vmatpush.msra.mxu0 0.0
        %644 = vmatpush.msra.mxu0 0.0
        %645 = vmatpush.msra.mxu0 0.0
        %646 = vmatpush.msra.mxu0 0.0
        %647 = vmatpush.msra.mxu0 0.0
        %648 = vmatpush.msra.mxu0 0.0
        %649 = vmatpush.msra.mxu0 0.0
        %650 = vmatpush.msra.mxu0 0.0
        %651 = vmatpush.msra.mxu0 0.0
        %652 = vmatpush.msra.mxu0 0.0
        %653 = vmatpush.msra.mxu0 0.0
        %654 = vmatpush.msra.mxu0 %v616
        %655 = vmatpush.msra.mxu0 %v615
        %656 = vmatpush.msra.mxu0 %v614
        %657 = vmatpush.msra.mxu0 %v613
        %658 = vmatmul.f32.gmra.mxu0 %v630
        %v659 = vpop.f32.mrf.mxu0
        %v660 = vadd.f32 0.0, %v659
        %661 = vmatmul.f32.gmra.mxu0 %v632
        %v662 = vpop.f32.mrf.mxu0
        %v663 = vadd.f32 0.0, %v662
        %664 = vmatmul.f32.gmra.mxu0 %v634
        %v665 = vpop.f32.mrf.mxu0
        %v666 = vadd.f32 0.0, %v665
        %667 = vmatmul.f32.gmra.mxu0 %v636
        %v668 = vpop.f32.mrf.mxu0
        %v669 = vadd.f32 0.0, %v668
        %670 = vmatmul.f32.gmra.mxu0 %v638
        %v671 = vpop.f32.mrf.mxu0
        %v672 = vadd.f32 0.0, %v671
        %673 = vmatmul.f32.gmra.mxu0 %v640
        %v674 = vpop.f32.mrf.mxu0
        %v675 = vadd.f32 0.0, %v674
        %676 = vdwg.mxu0
        %v677 = vadd.f32 %v606, %v660
        %v678 = vadd.f32 %v607, %v663
        %v679 = vadd.f32 %v608, %v666
        %v680 = vadd.f32 %v609, %v669
        %v681 = vadd.f32 %v610, %v672
        %v682 = vadd.f32 %v611, %v675
        %s683 = scalar_lea.vmem %s3, 64
        %v684 = vld [vmem:[%s683] sm:$0xff]
        %v685 = vld [vmem:[%s683 + $0x8] sm:$0xff]
        %v686 = vld [vmem:[%s683 + $0x10] sm:$0xff]
        %v687 = vld [vmem:[%s683 + $0x18] sm:$0xff]
        %v688 = vrot.slane %v547, 4
        %v689 = vrot.slane %v537, 4
        %v690 = vsel %vm308, %v688, %v689
        %v691 = vrot.slane %v539, 4
        %v692 = vsel %vm308, %v689, %v691
        %v693 = vrot.slane %v541, 4
        %v694 = vsel %vm308, %v691, %v693
        %v695 = vrot.slane %v543, 4
        %v696 = vsel %vm308, %v693, %v695
        %v697 = vrot.slane %v545, 4
        %v698 = vsel %vm308, %v695, %v697
        %v699 = vrot.slane %v544, 4
        %v700 = vsel %vm308, %v697, %v699
        %v701 = vsel %vm557, %v690, 0
        %v703 = vsel %vm557, %v692, 0
        %v705 = vsel %vm557, %v694, 0
        %v707 = vsel %vm557, %v696, 0
        %v709 = vsel %vm557, %v698, 0
        %v711 = vsel %vm557, %v700, 0
        %713 = vmatpush.msra.mxu0 0.0
        %714 = vmatpush.msra.mxu0 0.0
        %715 = vmatpush.msra.mxu0 0.0
        %716 = vmatpush.msra.mxu0 0.0
        %717 = vmatpush.msra.mxu0 0.0
        %718 = vmatpush.msra.mxu0 0.0
        %719 = vmatpush.msra.mxu0 0.0
        %720 = vmatpush.msra.mxu0 0.0
        %721 = vmatpush.msra.mxu0 0.0
        %722 = vmatpush.msra.mxu0 0.0
        %723 = vmatpush.msra.mxu0 0.0
        %724 = vmatpush.msra.mxu0 0.0
        %725 = vmatpush.msra.mxu0 %v687
        %726 = vmatpush.msra.mxu0 %v686
        %727 = vmatpush.msra.mxu0 %v685
        %728 = vmatpush.msra.mxu0 %v684
        %729 = vmatmul.f32.gmra.mxu0 %v701
        %v730 = vpop.f32.mrf.mxu0
        %v731 = vadd.f32 0.0, %v730
        %732 = vmatmul.f32.gmra.mxu0 %v703
        %v733 = vpop.f32.mrf.mxu0
        %v734 = vadd.f32 0.0, %v733
        %735 = vmatmul.f32.gmra.mxu0 %v705
        %v736 = vpop.f32.mrf.mxu0
        %v737 = vadd.f32 0.0, %v736
        %738 = vmatmul.f32.gmra.mxu0 %v707
        %v739 = vpop.f32.mrf.mxu0
        %v740 = vadd.f32 0.0, %v739
        %741 = vmatmul.f32.gmra.mxu0 %v709
        %v742 = vpop.f32.mrf.mxu0
        %v743 = vadd.f32 0.0, %v742
        %744 = vmatmul.f32.gmra.mxu0 %v711
        %v745 = vpop.f32.mrf.mxu0
        %v746 = vadd.f32 0.0, %v745
        %747 = vdwg.mxu0
        %v748 = vadd.f32 %v677, %v731
        %v749 = vadd.f32 %v678, %v734
        %v750 = vadd.f32 %v679, %v737
        %v751 = vadd.f32 %v680, %v740
        %v752 = vadd.f32 %v681, %v743
        %v753 = vadd.f32 %v682, %v746
        %v754 = vmax.f32 %v748, 0.0
        %v755 = vmax.f32 %v749, 0.0
        %v756 = vmax.f32 %v750, 0.0
        %v757 = vmax.f32 %v751, 0.0
        %v758 = vmax.f32 %v752, 0.0
        %v759 = vmax.f32 %v753, 0.0
        %v760 = vld [vmem:[%s5] sm:$0xff]
        %v761 = vld [vmem:[%s5 + $0x8] sm:$0xff]
        %v762 = vld [vmem:[%s6] sm:$0x1]
        %v764 = vperm.slane %v762, 0
        %v766 = vsel %vm329, %v296, 0
        %v768 = vsel %vm329, %v297, 0
        %v770 = vsel %vm329, %v298, 0
        %v772 = vsel %vm329, %v299, 0
        %v774 = vsel %vm329, %v300, 0
        %v776 = vsel %vm329, %v301, 0
        %778 = vmatpush.msra.mxu0 0.0
        %779 = vmatpush.msra.mxu0 0.0
        %780 = vmatpush.msra.mxu0 0.0
        %781 = vmatpush.msra.mxu0 0.0
        %782 = vmatpush.msra.mxu0 0.0
        %783 = vmatpush.msra.mxu0 0.0
        %784 = vmatpush.msra.mxu0 0.0
        %785 = vmatpush.msra.mxu0 0.0
        %786 = vmatpush.msra.mxu0 0.0
        %787 = vmatpush.msra.mxu0 0.0
        %788 = vmatpush.msra.mxu0 0.0
        %789 = vmatpush.msra.mxu0 0.0
        %790 = vmatpush.msra.mxu0 0.0
        %791 = vmatpush.msra.mxu0 0.0
        %792 = vmatpush.msra.mxu0 %v761
        %793 = vmatpush.msra.mxu0 %v760
        %794 = vmatmul.f32.gmra.mxu0 %v766
        %v795 = vpop.f32.mrf.mxu0
        %v796 = vadd.f32 %v764, %v795
        %797 = vmatmul.f32.gmra.mxu0 %v768
        %v798 = vpop.f32.mrf.mxu0
        %v799 = vadd.f32 %v764, %v798
        %800 = vmatmul.f32.gmra.mxu0 %v770
        %v801 = vpop.f32.mrf.mxu0
        %v802 = vadd.f32 %v764, %v801
        %803 = vmatmul.f32.gmra.mxu0 %v772
        %v804 = vpop.f32.mrf.mxu0
        %v805 = vadd.f32 %v764, %v804
        %806 = vmatmul.f32.gmra.mxu0 %v774
        %v807 = vpop.f32.mrf.mxu0
        %v808 = vadd.f32 %v764, %v807
        %809 = vmatmul.f32.gmra.mxu0 %v776
        %v810 = vpop.f32.mrf.mxu0
        %v811 = vadd.f32 %v764, %v810
        %812 = vdwg.mxu0
        %v813 = vadd.f32 %v754, %v796
        %v814 = vadd.f32 %v755, %v799
        %v815 = vadd.f32 %v756, %v802
        %v816 = vadd.f32 %v757, %v805
        %v817 = vadd.f32 %v758, %v808
        %v818 = vadd.f32 %v759, %v811
        %vm819 = vcmp.gt.f32.partialorder %v813, 0.0
        %vm820 = vcmp.gt.f32.partialorder %v814, 0.0
        %vm821 = vcmp.gt.f32.partialorder %v815, 0.0
        %vm822 = vcmp.gt.f32.partialorder %v816, 0.0
        %vm823 = vcmp.gt.f32.partialorder %v817, 0.0
        %vm824 = vcmp.gt.f32.partialorder %v818, 0.0
        %v825 = vmul.f32 %v813, 0.3
        %v826 = vmul.f32 %v814, 0.3
        %v827 = vmul.f32 %v815, 0.3
        %v828 = vmul.f32 %v816, 0.3
        %v829 = vmul.f32 %v817, 0.3
        %v830 = vmul.f32 %v818, 0.3
        %v831 = vsel %vm819, %v813, %v825
        %v832 = vsel %vm820, %v814, %v826
        %v833 = vsel %vm821, %v815, %v827
        %v834 = vsel %vm822, %v816, %v828
        %v835 = vsel %vm823, %v817, %v829
        %v836 = vsel %vm824, %v818, %v830
        %837 = vst.msk [vmem:[%s295] sm:$0xff] %vm557, %v831
        %838 = vst.msk [vmem:[%s295 + $0x8] sm:$0xff] %vm557, %v832
        %839 = vst.msk [vmem:[%s295 + $0x10] sm:$0xff] %vm557, %v833
        %840 = vst.msk [vmem:[%s295 + $0x18] sm:$0xff] %vm557, %v834
        %841 = vst.msk [vmem:[%s295 + $0x20] sm:$0xff] %vm557, %v835
        %842 = vst.msk [vmem:[%s295 + $0x28] sm:$0xff] %vm557, %v836
        %p843 = scmp.lt.s32.totalorder %s19, 1
        %s844 = scalar_select %p843, %s19, 1
        %s845 = smul.addr %s844, 6
        %s846 = smul.addr %s845, 8
        %s847 = scalar_lea.vmem %s7, %s846
        // Predicated region
        $region53: #{tpu_custom_call.1} parent=47 // pred_check
          %p848 = pneg %p189
        $region54: #{tpu_custom_call.1} parent=47 // pred_check_branch
          %850 = sbr.rel (%p848) target = $region56
        $region55: #{tpu_custom_call.1} parent=47 // pred_region
          _
        $region56: #{tpu_custom_call.1} parent=47 // pred_fallthru
          _
      $region48: #{tpu_custom_call.1} parent=5 // pred_fallthru
        _
      %p851 = scmp.le.s32.totalorder 2, %s14
      // Predicated region
      $region57: #{tpu_custom_call.1} parent=5 // pred_check
        %p852 = pneg %p851
      $region58: #{tpu_custom_call.1} parent=5 // pred_check_branch
        %854 = sbr.rel (%p852) target = $region60
      $region59: #{tpu_custom_call.1} parent=5 // pred_region
        %s855 = ssub.s32 %s14, 2
        // Predicated region
        $region61: #{tpu_custom_call.1} parent=59 // pred_check
          %p856 = pneg %p195
        $region62: #{tpu_custom_call.1} parent=59 // pred_check_branch
          %858 = sbr.rel (%p856) target = $region64
        $region63: #{tpu_custom_call.1} parent=59 // pred_region
          %p859 = scmp.lt.s32.totalorder %s20, 1
          %s860 = scalar_select %p859, %s20, 1
          %s861 = smul.addr %s860, 6
          %s862 = smul.addr %s861, 8
          %s863 = scalar_lea.vmem %s7, %s862
        $region64: #{tpu_custom_call.1} parent=59 // pred_fallthru
          _
      $region60: #{tpu_custom_call.1} parent=5 // pred_fallthru
        _
    $region6: #{tpu_custom_call.1} parent=1 // loop_footer
      %s18 = sadd.s32 1, %s14
    $region7: #{tpu_custom_call.1} parent=1 // loop_footer_branch
      %13 = sbr.rel target = $region3
    $region8: #{tpu_custom_call.1} parent=1 // loop_exit
      _
    %864 = vsyncpa [#allocation3], 1
    %s865 = scalar_lea.sflag [#allocation3], 1
    %866 = vsyncpa %s865, 1

</llo_original>
